<compile_context>
chip_gen: v7x
topology: tpu7x:2x2x1
jax: 0.10.0
libtpu: 0.0.40
codegen_flags: <defaults>
</compile_context>

<pallas_src>
import jax
import jax.numpy as jnp
from jax.experimental import pallas as pl
from jax.experimental.pallas import tpu as pltpu


def _proj_kernel(x_ref, w_ref, o_ref, acc_ref):
    # x_ref:   (tb, ts, cin)        input tile (original dtype, cast in-kernel)
    # w_ref:   (cin, cout)          VMEM-resident transposed weight
    # o_ref:   (tb, 1, ts, cout)    one replica slice of the output
    # acc_ref: (tb, ts, cout) f32   matmul result carried across the replica axis
    @pl.when(pl.program_id(2) == 0)
    def _():
        tb, ts, cin = x_ref.shape
        cout = w_ref.shape[1]
        # Fold (tb, ts) into the MXU M dim; cast on the VPU (no wrapper astype).
        x2d = x_ref[...].reshape(tb * ts, cin).astype(w_ref.dtype)
        y2d = jnp.dot(x2d, w_ref[...], preferred_element_type=jnp.float32)
        acc_ref[...] = y2d.reshape(tb, ts, cout)

    # Every replica step is just a VMEM -> HBM store of the carried result.
    o_ref[...] = acc_ref[...].astype(o_ref.dtype).reshape(o_ref.shape)


def prepare_weight(weight, compute_dtype=jnp.bfloat16):
    """Hoisted, call-once weight prep.

    weight: (cout, cin) -- PyTorch nn.Linear layout.
    Returns weight_t: (cin, cout), cast to compute_dtype (default bf16 so the
    kernel uses the native MXU path with f32 accumulation).
    """
    wt = weight.T
    if compute_dtype is not None and wt.dtype != compute_dtype:
        wt = wt.astype(compute_dtype)
    return wt


def _select_tiles(bs, seq, cin, cout, x_itemsize, w_itemsize, o_itemsize,
                  vmem_budget_bytes):
    """Pick (tb, ts) so VMEM stays under budget (a "row" = one (batch, seq) pos).

    Per-row VMEM:  2*cin*x_b (x, double-buffered) + 2*cout*o_b (out, double-
    buffered) + 4*cout (f32 scratch); plus fixed 2*cin*cout*w_b for the weight
    (worst case two buffers, in case single-buffering is unavailable).
    """
    per_row = 2 * cin * x_itemsize + 2 * cout * o_itemsize + 4 * cout
    fixed = 2 * cin * cout * w_itemsize
    avail = max(vmem_budget_bytes - fixed, 8 * per_row)
    max_rows = int(max(8, min(1024, avail // per_row)))

    if seq >= max_rows:
        tb = 1
        ts = (max_rows // 8) * 8
    else:
        ts = seq
        if seq % 8 == 0:
            # Fold batches into the matmul M dim (tile-aligned flatten).
            tb = max(1, min(bs, max_rows // seq))
        else:
            # TODO(synk): non-multiple-of-8 seq (e.g. CLIP text seq=77) is not
            # batch-folded, to keep the in-kernel flatten tile-aligned.
            tb = 1
    return tb, ts


def clip_proj_forward(x, weight_t, num_images_per_prompt=1, *,
                      out_dtype=None, vmem_budget_bytes=24 * 1024 * 1024):
    """Pallas implementation of CLIP_Proj.forward.

    x:        (bs, seq, cin)  -- any float dtype (cast in-kernel)
    weight_t: (cin, cout)     -- from prepare_weight()
    returns   (bs * num_images_per_prompt, seq, cout)
    """
    bs, seq, cin = x.shape
    cin_w, cout = weight_t.shape
    assert cin_w == cin, "weight / input in_channel mismatch"
    num = int(num_images_per_prompt)

    if out_dtype is None:
        out_dtype = weight_t.dtype

    x_b = jnp.dtype(x.dtype).itemsize
    w_b = jnp.dtype(weight_t.dtype).itemsize
    o_b = jnp.dtype(out_dtype).itemsize

    tb, ts = _select_tiles(bs, seq, cin, cout, x_b, w_b, o_b, vmem_budget_bytes)
    grid = (pl.cdiv(bs, tb), pl.cdiv(seq, ts), num)

    cost = pl.CostEstimate(
        flops=2 * bs * seq * cin * cout,            # matmul done once per (b, s)
        transcendentals=0,
        bytes_accessed=(bs * seq * cin * x_b        # x read once (not per replica)
                        + cin * cout * w_b          # weight read once
                        + bs * num * seq * cout * o_b),
    )

    out_shape = jax.ShapeDtypeStruct((bs, num, seq, cout), out_dtype)

    def build(single_buffer_weight):
        if single_buffer_weight:
            # Constant index_map -> the default second buffer is dead VMEM.
            w_spec = pl.BlockSpec((cin, cout), lambda b, s, r: (0, 0),
                                  pipeline_mode=pl.Buffered(1))
        else:
            w_spec = pl.BlockSpec((cin, cout), lambda b, s, r: (0, 0))
        return pl.pallas_call(
            _proj_kernel,
            out_shape=out_shape,
            grid_spec=pltpu.PrefetchScalarGridSpec(
                num_scalar_prefetch=0,
                grid=grid,
                in_specs=[
                    # x block is re-used across the (innermost) replica axis:
                    # its block index does not change with r, so no re-DMA.
                    pl.BlockSpec((tb, ts, cin), lambda b, s, r: (b, s, 0)),
                    w_spec,
                ],
                out_specs=pl.BlockSpec((tb, 1, ts, cout),
                                       lambda b, s, r: (b, r, s, 0)),
                scratch_shapes=[pltpu.VMEM((tb, ts, cout), jnp.float32)],
            ),
            compiler_params=pltpu.CompilerParams(
                # bs/seq split across TensorCores; replica axis carries the
                # scratch dependency so it must be "arbitrary".
                dimension_semantics=("parallel", "parallel", "arbitrary"),
                vmem_limit_bytes=64 * 1024 * 1024),
            cost_estimate=cost,
        )

    try:
        y = build(single_buffer_weight=True)(x, weight_t)
    except Exception:
        # pipeline_mode=pl.Buffered(1) unsupported on this jax version:
        # fall back to default (double-buffered) weight block.
        y = build(single_buffer_weight=False)(x, weight_t)

    # (bs, num, seq, cout) -> (bs*num, seq, cout): pure view, matches
    # torch repeat(1, num, 1).view(bs*num, seq, -1).
    return y.reshape(bs * num, seq, cout)


if __name__ == "__main__":
    key = jax.random.PRNGKey(0)
    k_x, k_w = jax.random.split(key)

    bs, seq = 2, 8
    in_channel, out_channel = 32, 64
    num_images_per_prompt = 2

    x = jax.random.normal(k_x, (bs, seq, in_channel), dtype=jnp.float32)
    # TODO(synk): original module loads refer_proj weights from ck_path via
    # torch.load; deterministic synthetic weights are used here instead.
    weight = jax.random.normal(
        k_w, (out_channel, in_channel), dtype=jnp.float32) * 0.02

    # Plain-JAX reference of the module forward.
    ref1 = jnp.einsum("bsi,oi->bso", x, weight)
    ref = jnp.tile(ref1, (1, num_images_per_prompt, 1)).reshape(
        bs * num_images_per_prompt, seq, out_channel)

    # f32 compute path (tight correctness check).
    wt_f32 = prepare_weight(weight, compute_dtype=jnp.float32)
    out_f32 = clip_proj_forward(x, wt_f32, num_images_per_prompt)
    out_f32 = jax.block_until_ready(out_f32)
    assert out_f32.shape == (bs * num_images_per_prompt, seq, out_channel)
    assert jnp.allclose(out_f32, ref, atol=1e-5, rtol=1e-5)

    # Default bf16 compute path (MXU-native operands, in-kernel x cast,
    # f32 accumulation).
    wt_bf16 = prepare_weight(weight)  # bf16 by default
    out_bf16 = clip_proj_forward(x, wt_bf16, num_images_per_prompt)
    out_bf16 = jax.block_until_ready(out_bf16)
    assert out_bf16.shape == (bs * num_images_per_prompt, seq, out_channel)
    assert out_bf16.dtype == jnp.bfloat16
    assert jnp.allclose(out_bf16.astype(jnp.float32), ref, atol=3e-2, rtol=3e-2)

    # num_images_per_prompt = 1 path (no replication).
    out_one = clip_proj_forward(x, wt_f32, 1)
    out_one = jax.block_until_ready(out_one)
    assert out_one.shape == (bs, seq, out_channel)
    assert jnp.allclose(out_one, ref1, atol=1e-5, rtol=1e-5)

    print("KERNEL_OK")
</pallas_src>

<mosaic_0001>
module attributes {stable_mosaic.version = 11 : i64} {
  func.func @_proj_kernel(%arg0: i32, %arg1: i32, %arg2: i32, %arg3: memref<2x8x32xf32, #tpu.memory_space<vmem>>, %arg4: memref<32x64xf32, #tpu.memory_space<vmem>>, %arg5: memref<2x1x8x64xf32, #tpu.memory_space<vmem>>, %arg6: memref<2x8x64xf32, #tpu.memory_space<vmem>>) attributes {dimension_semantics = [#tpu.dimension_semantics<parallel>, #tpu.dimension_semantics<parallel>, #tpu.dimension_semantics<arbitrary>], iteration_bounds = array<i64: 1, 1, 2>, scalar_prefetch = 0 : i64, scratch_operands = 1 : i64, tpu.core_type = #tpu.core_type<tc>, window_params = [{transform_indices = @transform_0, window_bounds = array<i64: 2, 8, 32>}, {pipeline_mode = #tpu.pipeline_mode<synchronous>, transform_indices = @transform_1, window_bounds = array<i64: 32, 64>}, {transform_indices = @transform_2, window_bounds = array<i64: 2, 1, 8, 64>}]} {
    %c0_i32 = arith.constant 0 : i32
    %0 = arith.cmpi eq, %arg2, %c0_i32 : i32
    %1 = arith.extui %0 : i1 to i32
    %c0_i32_0 = arith.constant 0 : i32
    %2 = arith.cmpi ne, %1, %c0_i32_0 : i32
    scf.if %2 {
      %c0_7 = arith.constant 0 : index
      %c0_8 = arith.constant 0 : index
      %c0_9 = arith.constant 0 : index
      %6 = vector.load %arg3[%c0_7, %c0_8, %c0_9] : memref<2x8x32xf32, #tpu.memory_space<vmem>>, vector<2x8x32xf32>
      %7 = vector.shape_cast %6 : vector<2x8x32xf32> to vector<16x32xf32>
      %c0_10 = arith.constant 0 : index
      %c0_11 = arith.constant 0 : index
      %8 = vector.load %arg4[%c0_10, %c0_11] : memref<32x64xf32, #tpu.memory_space<vmem>>, vector<32x64xf32>
      %cst = arith.constant dense<0.000000e+00> : vector<16x64xf32>
      %9 = tpu.matmul %7, %8, %cst {dimension_numbers = #tpu.dot_dimension_numbers<[1], [0], [0], [1], [0, 0, 1, 1], [], []>} : vector<16x32xf32>, vector<32x64xf32>, vector<16x64xf32> -> vector<16x64xf32>
      %10 = vector.shape_cast %9 : vector<16x64xf32> to vector<2x8x64xf32>
      %c0_12 = arith.constant 0 : index
      %c0_13 = arith.constant 0 : index
      %c0_14 = arith.constant 0 : index
      %11 = vector.load %arg6[%c0_12, %c0_13, %c0_14] : memref<2x8x64xf32, #tpu.memory_space<vmem>>, vector<2x8x64xf32>
      tpu.vector_store %arg6[%c0_12, %c0_13, %c0_14], %10 {strides = array<i32>} : memref<2x8x64xf32, #tpu.memory_space<vmem>>, vector<2x8x64xf32>,
    } else {
    }
    %c0 = arith.constant 0 : index
    %c0_1 = arith.constant 0 : index
    %c0_2 = arith.constant 0 : index
    %3 = vector.load %arg6[%c0, %c0_1, %c0_2] : memref<2x8x64xf32, #tpu.memory_space<vmem>>, vector<2x8x64xf32>
    %4 = vector.shape_cast %3 : vector<2x8x64xf32> to vector<2x1x8x64xf32>
    %c0_3 = arith.constant 0 : index
    %c0_4 = arith.constant 0 : index
    %c0_5 = arith.constant 0 : index
    %c0_6 = arith.constant 0 : index
    %5 = vector.load %arg5[%c0_3, %c0_4, %c0_5, %c0_6] : memref<2x1x8x64xf32, #tpu.memory_space<vmem>>, vector<2x1x8x64xf32>
    tpu.vector_store %arg5[%c0_3, %c0_4, %c0_5, %c0_6], %4 {strides = array<i32>} : memref<2x1x8x64xf32, #tpu.memory_space<vmem>>, vector<2x1x8x64xf32>,
    return
  }
  func.func @transform_0(%arg0: i32, %arg1: i32, %arg2: i32) -> (i32, i32, i32) {
    %c0_i32 = arith.constant 0 : i32
    %c0_i32_0 = arith.constant 0 : i32
    return %arg0, %arg1, %c0_i32 : i32, i32, i32
  }
  func.func @transform_1(%arg0: i32, %arg1: i32, %arg2: i32) -> (i32, i32) {
    %c0_i32 = arith.constant 0 : i32
    %c0_i32_0 = arith.constant 0 : i32
    %c0_i32_1 = arith.constant 0 : i32
    return %c0_i32, %c0_i32_0 : i32, i32
  }
  func.func @transform_2(%arg0: i32, %arg1: i32, %arg2: i32) -> (i32, i32, i32, i32) {
    %c0_i32 = arith.constant 0 : i32
    %c0_i32_0 = arith.constant 0 : i32
    return %arg0, %arg2, %arg1, %c0_i32 : i32, i32, i32, i32
  }
}

module attributes {stable_mosaic.version = 11 : i64} {
  func.func @_proj_kernel(%arg0: i32, %arg1: i32, %arg2: i32, %arg3: memref<2x8x32xf32, #tpu.memory_space<vmem>>, %arg4: memref<32x64xf32, #tpu.memory_space<vmem>>, %arg5: memref<2x1x8x64xf32, #tpu.memory_space<vmem>>, %arg6: memref<2x8x64xf32, #tpu.memory_space<vmem>>) attributes {dimension_semantics = [#tpu.dimension_semantics<parallel>, #tpu.dimension_semantics<parallel>, #tpu.dimension_semantics<arbitrary>], iteration_bounds = array<i64: 1, 1, 2>, scalar_prefetch = 0 : i64, scratch_operands = 1 : i64, tpu.core_type = #tpu.core_type<tc>, window_params = [{transform_indices = @transform_0, window_bounds = array<i64: 2, 8, 32>}, {pipeline_mode = #tpu.pipeline_mode<synchronous>, transform_indices = @transform_1, window_bounds = array<i64: 32, 64>}, {transform_indices = @transform_2, window_bounds = array<i64: 2, 1, 8, 64>}]} {
    %c0_i32 = arith.constant 0 : i32
    %0 = arith.cmpi eq, %arg2, %c0_i32 : i32
    %1 = arith.extui %0 : i1 to i32
    %c0_i32_0 = arith.constant 0 : i32
    %2 = arith.cmpi ne, %1, %c0_i32_0 : i32
    scf.if %2 {
      %c0_7 = arith.constant 0 : index
      %c0_8 = arith.constant 0 : index
      %c0_9 = arith.constant 0 : index
      %6 = vector.load %arg3[%c0_7, %c0_8, %c0_9] : memref<2x8x32xf32, #tpu.memory_space<vmem>>, vector<2x8x32xf32>
      %7 = vector.shape_cast %6 : vector<2x8x32xf32> to vector<16x32xf32>
      %c0_10 = arith.constant 0 : index
      %c0_11 = arith.constant 0 : index
      %8 = vector.load %arg4[%c0_10, %c0_11] : memref<32x64xf32, #tpu.memory_space<vmem>>, vector<32x64xf32>
      %cst = arith.constant dense<0.000000e+00> : vector<16x64xf32>
      %9 = tpu.matmul %7, %8, %cst {dimension_numbers = #tpu.dot_dimension_numbers<[1], [0], [0], [1], [0, 0, 1, 1], [], []>} : vector<16x32xf32>, vector<32x64xf32>, vector<16x64xf32> -> vector<16x64xf32>
      %10 = vector.shape_cast %9 : vector<16x64xf32> to vector<2x8x64xf32>
      %c0_12 = arith.constant 0 : index
      %c0_13 = arith.constant 0 : index
      %c0_14 = arith.constant 0 : index
      %11 = vector.load %arg6[%c0_12, %c0_13, %c0_14] : memref<2x8x64xf32, #tpu.memory_space<vmem>>, vector<2x8x64xf32>
      tpu.vector_store %arg6[%c0_12, %c0_13, %c0_14], %10 {strides = array<i32>} : memref<2x8x64xf32, #tpu.memory_space<vmem>>, vector<2x8x64xf32>,
    } else {
    }
    %c0 = arith.constant 0 : index
    %c0_1 = arith.constant 0 : index
    %c0_2 = arith.constant 0 : index
    %3 = vector.load %arg6[%c0, %c0_1, %c0_2] : memref<2x8x64xf32, #tpu.memory_space<vmem>>, vector<2x8x64xf32>
    %4 = vector.shape_cast %3 : vector<2x8x64xf32> to vector<2x1x8x64xf32>
    %c0_3 = arith.constant 0 : index
    %c0_4 = arith.constant 0 : index
    %c0_5 = arith.constant 0 : index
    %c0_6 = arith.constant 0 : index
    %5 = vector.load %arg5[%c0_3, %c0_4, %c0_5, %c0_6] : memref<2x1x8x64xf32, #tpu.memory_space<vmem>>, vector<2x1x8x64xf32>
    tpu.vector_store %arg5[%c0_3, %c0_4, %c0_5, %c0_6], %4 {strides = array<i32>} : memref<2x1x8x64xf32, #tpu.memory_space<vmem>>, vector<2x1x8x64xf32>,
    return
  }
  func.func @transform_0(%arg0: i32, %arg1: i32, %arg2: i32) -> (i32, i32, i32) {
    %c0_i32 = arith.constant 0 : i32
    %c0_i32_0 = arith.constant 0 : i32
    return %arg0, %arg1, %c0_i32 : i32, i32, i32
  }
  func.func @transform_1(%arg0: i32, %arg1: i32, %arg2: i32) -> (i32, i32) {
    %c0_i32 = arith.constant 0 : i32
    %c0_i32_0 = arith.constant 0 : i32
    %c0_i32_1 = arith.constant 0 : i32
    return %c0_i32, %c0_i32_0 : i32, i32
  }
  func.func @transform_2(%arg0: i32, %arg1: i32, %arg2: i32) -> (i32, i32, i32, i32) {
    %c0_i32 = arith.constant 0 : i32
    %c0_i32_0 = arith.constant 0 : i32
    return %arg0, %arg2, %arg1, %c0_i32 : i32, i32, i32, i32
  }
}

</mosaic_0001>

<llo_original>
// kernel: tpu_custom_call.1
$region0: #{tpu_custom_call.1}
  #allocation0 [shape = 'u32[]', space=smem, size = 0x4, offset = 0x4, fixed_abs, tag = 'smem constant byte address 0x4 - core index']
  #allocation1 [shape = 'u32[144,128]{1,0:T(1,128)}', space=vmem, size = 0x12000, scoped, tag = 'internal scratch']
  #allocation2 [shape = 'f32[2,8,64]{2,1,0:T(8,128)}', space=vmem, size = 0x2000, scoped, tag = 'scratch operand']
  %s0 = inlined_call_operand.hbm [shape: f32[2,8,32], index: 0, kind: input, shape index: {}]
  %s1 = inlined_call_operand.hbm [shape: f32[32,64], index: 1, kind: input, shape index: {}]
  %s2 = inlined_call_operand.hbm [shape: f32[2,2,8,64], index: 2, kind: output, shape index: {}]
  %s3 = sld [smem:[#allocation0]]
  $region53: #{tpu_custom_call.1} parent=0
    _
  %s5 = ssub.s32 1, %s3
  %s6 = scalar_select 0, %s5, %s3
  $region1: #{tpu_custom_call.1} parent=0
    #allocation3 [shape = 'u8[8192]{0}', space=vmem, size = 0x2000, scoped, tag = 'input window, operand 0, single buffered']
    #allocation4 [shape = 's32[2]{0}', space=sflag, size = 0x8, scoped, tag = 'scoped memory for tpu_custom_call.1']
    #allocation5 [shape = 's32[2]{0}', space=sflag, size = 0x8, scoped, tag = 'scoped memory for tpu_custom_call.1']
    #allocation6 [shape = 'u8[16384]{0}', space=vmem, size = 0x4000, scoped, tag = 'input window, operand 1, single buffered']
    #allocation7 [shape = 's32[1]{0}', space=sflag, size = 0x4, scoped, tag = 'scoped memory for tpu_custom_call.1']
    #allocation8 [shape = 'u8[16384]{0}', space=vmem, size = 0x4000, scoped, tag = 'output window, operand 0']
    %7 = vsyncpa [#allocation4], 0
    %8 = vsyncpa [#allocation7], 0
    %9 = vsyncpa [#allocation5], 0
    %s10 = scalar_lea.sflag [#allocation5], 1
    %11 = vsyncpa %s10, 0
    loop: start=0, step=1, limit=4
    $region2: #{tpu_custom_call.1} parent=1 // loop_pre_header
      _
    $region3: #{tpu_custom_call.1} parent=1 // loop_header
      %s13 = sphi 0, %s17
      %p14 = scmp.ge.s32.totalorder %s13, 4
      %s20 = sphi 0, %s39
      %s21 = sphi 0, %s35
      %s22 = sphi 0, %s31
      %s23 = sphi 0, %s20
      %s24 = sphi 0, %s21
      %s25 = sphi 0, %s22
      %s26 = sphi 0, %s23
      %s27 = sphi 0, %s24
      %s28 = sphi 0, %s25
      %s44 = sphi 0, %s46
      %s47 = sphi 0, %s44
      %s48 = sphi 0, %s47
      %s64 = sphi 0, %s48
      %s68 = sphi 0, %s68
      %s70 = sphi 0, %s68
      %s71 = sphi 0, %s70
      %s85 = sphi 0, %s71
      %s95 = sphi 0, %s97
      %s98 = sphi 0, %s95
      %s99 = sphi 0, %s98
      %s115 = sphi 0, %s99
    $region4: #{tpu_custom_call.1} parent=1 // loop_header_branch
      %16 = sbr.rel (%p14) target = $region8
    $region5: #{tpu_custom_call.1} parent=1 // loop_body
      %s18 = ssub.s32 %s13, 1
      %s19 = ssub.s32 %s13, 2
      %s29 = sadd.s32 1, %s22
      %p30 = scmp.ge.s32.totalorder %s29, 2
      %s31 = scalar_select %p30, 0, %s29
      %s32 = sadd.s32 1, %s21
      %s33 = scalar_select %p30, %s32, %s21
      %p34 = scmp.ge.s32.totalorder %s33, 1
      %s35 = scalar_select %p34, 0, %s33
      %s36 = sadd.s32 1, %s20
      %s37 = scalar_select %p34, %s36, %s20
      %p38 = scmp.ge.s32.totalorder %s37, 1
      %s39 = scalar_select %p38, 0, %s37
      %s40 = ssub.s32 %s20, %s39
      %s41 = ssub.s32 %s21, %s35
      %s42 = sor.u32 %s40, %s41
      %p43 = scmp.eq.s32.totalorder %s42, 0
      %s45 = sadd.s32 %s44, 1
      %s46 = scalar_select %p43, %s44, %s45
      %p49 = pneg %p43
      %p50 = scmp.eq.s32.totalorder %s13, 1
      %p51 = por %p49, %p50
      %p52 = scmp.ne.s32.totalorder %s44, %s47
      %p53 = scmp.eq.s32.totalorder %s13, 0
      %p54 = por %p52, %p53
      %p55 = scmp.ne.s32.totalorder %s44, %s47
      %p56 = scmp.eq.s32.totalorder %s18, 1
      %p57 = por %p55, %p56
      %p58 = scmp.ne.s32.totalorder %s47, %s48
      %p59 = scmp.eq.s32.totalorder %s18, 0
      %p60 = por %p58, %p59
      %p61 = scmp.ne.s32.totalorder %s47, %s48
      %p62 = scmp.eq.s32.totalorder %s19, 1
      %p63 = por %p61, %p62
      %p65 = scmp.ne.s32.totalorder %s48, %s64
      %p66 = scmp.eq.s32.totalorder %s19, 0
      %p67 = por %p65, %p66
      %s69 = sadd.s32 %s68, 1
      %p72 = scmp.eq.s32.totalorder %s13, 1
      %p73 = scmp.ne.s32.totalorder %s68, %s70
      %p74 = scmp.eq.s32.totalorder %s13, 0
      %p75 = por %p73, %p74
      %p76 = scmp.ne.s32.totalorder %s68, %s70
      %p77 = scmp.eq.s32.totalorder %s18, 1
      %p78 = por %p76, %p77
      %p79 = scmp.ne.s32.totalorder %s70, %s71
      %p80 = scmp.eq.s32.totalorder %s18, 0
      %p81 = por %p79, %p80
      %p82 = scmp.ne.s32.totalorder %s70, %s71
      %p83 = scmp.eq.s32.totalorder %s19, 1
      %p84 = por %p82, %p83
      %p86 = scmp.ne.s32.totalorder %s71, %s85
      %p87 = scmp.eq.s32.totalorder %s19, 0
      %p88 = por %p86, %p87
      %s89 = ssub.s32 %s20, %s39
      %s90 = ssub.s32 %s22, %s31
      %s91 = sor.u32 %s89, %s90
      %s92 = ssub.s32 %s21, %s35
      %s93 = sor.u32 %s91, %s92
      %p94 = scmp.eq.s32.totalorder %s93, 0
      %s96 = sadd.s32 %s95, 1
      %s97 = scalar_select %p94, %s95, %s96
      %p100 = pneg %p94
      %p101 = scmp.eq.s32.totalorder %s13, 1
      %p102 = por %p100, %p101
      %p103 = scmp.ne.s32.totalorder %s95, %s98
      %p104 = scmp.eq.s32.totalorder %s13, 0
      %p105 = por %p103, %p104
      %p106 = scmp.ne.s32.totalorder %s95, %s98
      %p107 = scmp.eq.s32.totalorder %s18, 1
      %p108 = por %p106, %p107
      %p109 = scmp.ne.s32.totalorder %s98, %s99
      %p110 = scmp.eq.s32.totalorder %s18, 0
      %p111 = por %p109, %p110
      %p112 = scmp.ne.s32.totalorder %s98, %s99
      %p113 = scmp.eq.s32.totalorder %s19, 1
      %p114 = por %p112, %p113
      %p116 = scmp.ne.s32.totalorder %s99, %s115
      %p117 = scmp.eq.s32.totalorder %s19, 0
      %p118 = por %p116, %p117
      %p119 = scmp.le.s32.totalorder 1, %s13
      %p120 = scmp.lt.s32.totalorder %s13, 3
      %p121 = pnand %p119, %p120
      %p122 = pneg %p121
      // Predicated region
      $region9: #{tpu_custom_call.1} parent=5 // pred_check
        _
      $region10: #{tpu_custom_call.1} parent=5 // pred_check_branch
        %124 = sbr.rel (%p121) target = $region12
      $region11: #{tpu_custom_call.1} parent=5 // pred_region
        %s125 = ssub.s32 %s13, 1
        // Predicated region
        $region13: #{tpu_custom_call.1} parent=11 // pred_check
          %p126 = pneg %p60
        $region14: #{tpu_custom_call.1} parent=11 // pred_check_branch
          %128 = sbr.rel (%p126) target = $region16
        $region15: #{tpu_custom_call.1} parent=11 // pred_region
          %s129 = smul.u32 2, %s23
          %s131 = ssub.s32 256, 256
          %132 = vsyncadd [#allocation4], %s131
          %s133 = sadd.s32 %s24, %s129
          %s134 = smul.addr %s133, 128
          %s135 = scalar_lea.hbm %s0, %s134
          %s136 = sshll.u32 [#allocation3], 4
          %s137 = int_to_ptr.vmem [resolvable:$true] %s136
          %142 = dma.hbm_to_vmem [thread:$0]  %s135, 256, %s137, [#allocation4], 128, 128, 8
        $region16: #{tpu_custom_call.1} parent=11 // pred_fallthru
          _
        // Predicated region
        $region17: #{tpu_custom_call.1} parent=11 // pred_check
          %p143 = pneg %p81
        $region18: #{tpu_custom_call.1} parent=11 // pred_check_branch
          %145 = sbr.rel (%p143) target = $region20
        $region19: #{tpu_custom_call.1} parent=11 // pred_region
          %s147 = ssub.s32 512, 512
          %148 = vsyncadd [#allocation7], %s147
          %s149 = sshll.u32 [#allocation6], 4
          %s150 = int_to_ptr.vmem [resolvable:$true] %s149
          %155 = dma.hbm_to_vmem [thread:$0]  %s1, 512, %s150, [#allocation7], 128, 128, 8
        $region20: #{tpu_custom_call.1} parent=11 // pred_fallthru
          _
      $region12: #{tpu_custom_call.1} parent=5 // pred_fallthru
        _
      %p156 = scmp.lt.s32.totalorder %s13, 2
      // Predicated region
      $region21: #{tpu_custom_call.1} parent=5 // pred_check
        %p157 = pneg %p156
      $region22: #{tpu_custom_call.1} parent=5 // pred_check_branch
        %159 = sbr.rel (%p157) target = $region24
      $region23: #{tpu_custom_call.1} parent=5 // pred_region
        _
      $region24: #{tpu_custom_call.1} parent=5 // pred_fallthru
        _
      %p160 = scmp.le.s32.totalorder 1, %s13
      %p161 = scmp.lt.s32.totalorder %s13, 3
      %p162 = pnand %p160, %p161
      %p163 = pneg %p162
      // Predicated region
      $region25: #{tpu_custom_call.1} parent=5 // pred_check
        _
      $region26: #{tpu_custom_call.1} parent=5 // pred_check_branch
        %165 = sbr.rel (%p162) target = $region28
      $region27: #{tpu_custom_call.1} parent=5 // pred_region
        %s166 = ssub.s32 %s13, 1
        // Predicated region
        $region29: #{tpu_custom_call.1} parent=27 // pred_check
          %p167 = pneg %p60
        $region30: #{tpu_custom_call.1} parent=27 // pred_check_branch
          %169 = sbr.rel (%p167) target = $region32
        $region31: #{tpu_custom_call.1} parent=27 // pred_region
          %170 = dma.done [#allocation4], 256
        $region32: #{tpu_custom_call.1} parent=27 // pred_fallthru
          _
        // Predicated region
        $region33: #{tpu_custom_call.1} parent=27 // pred_check
          %p171 = pneg %p81
        $region34: #{tpu_custom_call.1} parent=27 // pred_check_branch
          %173 = sbr.rel (%p171) target = $region36
        $region35: #{tpu_custom_call.1} parent=27 // pred_region
          %174 = dma.done [#allocation7], 512
        $region36: #{tpu_custom_call.1} parent=27 // pred_fallthru
          _
        %p175 = pneg %p60
        %p176 = pneg %p57
        %p177 = pneg %p81
        %p178 = pneg %p78
        %p179 = pneg %p111
        %p180 = pneg %p108
        %s181 = sand.u32 %s98, 1
        %s182 = scalar_lea.sflag [#allocation5], %s181
        %s183 = sand.u32 %s98, 1
        %s184 = smul.addr %s183, 16
        %s185 = scalar_lea.vmem [#allocation8], %s184
        %s186 = smul.u32 2, %s23
        %s187 = smul.u32 2, %s23
        %p188 = scmp.eq.s32.totalorder %s25, 0
        // Predicated region
        $region37: #{tpu_custom_call.1} parent=27 // pred_check
          %p189 = pneg %p188
        $region38: #{tpu_custom_call.1} parent=27 // pred_check_branch
          %191 = sbr.rel (%p189) target = $region40
        $region39: #{tpu_custom_call.1} parent=27 // pred_region
          %v192 = vld [vmem:[#allocation3] sm:$0xff]
          %v193 = vld [vmem:[#allocation3 + $0x8] sm:$0xff]
          %v194 = vld [vmem:[#allocation6] sm:$0xff]
          %v195 = vld [vmem:[#allocation6 + $0x8] sm:$0xff]
          %v196 = vld [vmem:[#allocation6 + $0x10] sm:$0xff]
          %v197 = vld [vmem:[#allocation6 + $0x18] sm:$0xff]
          %vm198 = vcmask 261120
          %v200 = vsel %vm198, %v192, 0
          %v203 = vsel %vm198, %v193, 0
          %205 = vmatprep.subr.mxu0 0.0
          %206 = vmatpush1.msra.mxu0 %v194
          %207 = vmatprep.subr.mxu0 0.0
          %208 = vmatpush1.msra.mxu0 %v195
          %209 = vmatprep.subr.mxu0 0.0
          %210 = vmatpush1.msra.mxu0 %v196
          %211 = vmatprep.subr.mxu0 0.0
          %212 = vmatpush1.msra.mxu0 %v197
          %213 = vmatprep.subr.mxu0 0.0
          %214 = vmatpush1.msra.mxu0 0.0
          %215 = vmatprep.subr.mxu0 0.0
          %216 = vmatpush1.msra.mxu0 0.0
          %217 = vmatprep.subr.mxu0 0.0
          %218 = vmatpush1.msra.mxu0 0.0
          %219 = vmatprep.subr.mxu0 0.0
          %220 = vmatpush1.msra.mxu0 0.0
          %221 = vmatprep.subr.mxu0 0.0
          %222 = vmatpush1.msra.mxu0 0.0
          %223 = vmatprep.subr.mxu0 0.0
          %224 = vmatpush1.msra.mxu0 0.0
          %225 = vmatprep.subr.mxu0 0.0
          %226 = vmatpush1.msra.mxu0 0.0
          %227 = vmatprep.subr.mxu0 0.0
          %228 = vmatpush1.msra.mxu0 0.0
          %229 = vmatprep.subr.mxu0 0.0
          %230 = vmatpush1.msra.mxu0 0.0
          %231 = vmatprep.subr.mxu0 0.0
          %232 = vmatpush1.msra.mxu0 0.0
          %233 = vmatprep.subr.mxu0 0.0
          %234 = vmatpush1.msra.mxu0 0.0
          %235 = vmatprep.subr.mxu0 0.0
          %236 = vmatpush1.msra.mxu0 0.0
          %237 = vmatprep.subr.mxu0 0.0
          %238 = vmatpush1.msra.mxu0 0.0
          %239 = vmatprep.subr.mxu0 0.0
          %240 = vmatpush1.msra.mxu0 0.0
          %241 = vmatprep.subr.mxu0 0.0
          %242 = vmatpush1.msra.mxu0 0.0
          %243 = vmatprep.subr.mxu0 0.0
          %244 = vmatpush1.msra.mxu0 0.0
          %245 = vmatprep.subr.mxu0 0.0
          %246 = vmatpush1.msra.mxu0 0.0
          %247 = vmatprep.subr.mxu0 0.0
          %248 = vmatpush1.msra.mxu0 0.0
          %249 = vmatprep.subr.mxu0 0.0
          %250 = vmatpush1.msra.mxu0 0.0
          %251 = vmatprep.subr.mxu0 0.0
          %252 = vmatpush1.msra.mxu0 0.0
          %253 = vmatprep.subr.mxu0 0.0
          %254 = vmatpush1.msra.mxu0 0.0
          %255 = vmatprep.subr.mxu0 0.0
          %256 = vmatpush1.msra.mxu0 0.0
          %257 = vmatprep.subr.mxu0 0.0
          %258 = vmatpush1.msra.mxu0 0.0
          %259 = vmatprep.subr.mxu0 0.0
          %260 = vmatpush1.msra.mxu0 0.0
          %261 = vmatprep.subr.mxu0 0.0
          %262 = vmatpush1.msra.mxu0 0.0
          %263 = vmatprep.subr.mxu0 0.0
          %264 = vmatpush1.msra.mxu0 0.0
          %265 = vmatprep.subr.mxu0 0.0
          %266 = vmatpush1.msra.mxu0 0.0
          %267 = vmatprep.subr.mxu0 0.0
          %268 = vmatpush1.msra.mxu0 0.0
          %269 = vmatprep.mubr.f32.mxu0 0.0
          %270 = vmatmul.mubr.f32.gmra.mrb[0].mxu0 %v200
          %v271 = vpop.f32.mrb[0].mxu0
          %v272 = vadd.f32 0.0, %v271
          %v273 = vpop.f32.mrb[0].mxu0
          %274 = vmatprep.mubr.f32.mxu0 0.0
          %275 = vmatmul.mubr.f32.gmra.mrb[0].mxu0 %v203
          %v276 = vpop.f32.mrb[0].mxu0
          %v277 = vadd.f32 0.0, %v276
          %v278 = vpop.f32.mrb[0].mxu0
          %279 = vdwg.mxu0
          %vm280 = vcmask 523264
          %281 = vst.msk [vmem:[#allocation2] sm:$0xff] %vm280, %v272
          %282 = vst.msk [vmem:[#allocation2 + $0x8] sm:$0xff] %vm280, %v277
        $region40: #{tpu_custom_call.1} parent=27 // pred_fallthru
          _
        %v283 = vld [vmem:[#allocation2] sm:$0xff]
        %v284 = vld [vmem:[#allocation2 + $0x8] sm:$0xff]
        %vm285 = vcmask 523264
        %286 = vst.msk [vmem:[%s185] sm:$0xff] %vm285, %v283
        %287 = vst.msk [vmem:[%s185 + $0x8] sm:$0xff] %vm285, %v284
        %s288 = sand.u32 %s98, 1
        %s289 = scalar_lea.sflag [#allocation5], %s288
        %s290 = sand.u32 %s98, 1
        %s291 = smul.addr %s290, 16
        %s292 = scalar_lea.vmem [#allocation8], %s291
        // Predicated region
        $region41: #{tpu_custom_call.1} parent=27 // pred_check
          %p293 = pneg %p108
        $region42: #{tpu_custom_call.1} parent=27 // pred_check_branch
          %295 = sbr.rel (%p293) target = $region44
        $region43: #{tpu_custom_call.1} parent=27 // pred_region
          %s296 = smul.u32 2, %s23
          %s298 = ssub.s32 256, 256
          %299 = vsyncadd %s289, %s298
          %s300 = sadd.s32 %s24, %s25
          %s301 = smul.addr %s296, 2
          %s302 = sadd.s32 %s300, %s301
          %s303 = smul.addr %s302, 128
          %s304 = scalar_lea.hbm %s2, %s303
          %s305 = sshll.u32 %s292, 4
          %s306 = int_to_ptr.vmem [resolvable:$true] %s305
          %311 = dma.vmem_to_hbm [thread:$0]  %s306, 256, %s304, %s289, 128, 256, 8
        $region44: #{tpu_custom_call.1} parent=27 // pred_fallthru
          _
      $region28: #{tpu_custom_call.1} parent=5 // pred_fallthru
        _
      %p312 = scmp.le.s32.totalorder 2, %s13
      // Predicated region
      $region45: #{tpu_custom_call.1} parent=5 // pred_check
        %p313 = pneg %p312
      $region46: #{tpu_custom_call.1} parent=5 // pred_check_branch
        %315 = sbr.rel (%p313) target = $region48
      $region47: #{tpu_custom_call.1} parent=5 // pred_region
        %s316 = ssub.s32 %s13, 2
        // Predicated region
        $region49: #{tpu_custom_call.1} parent=47 // pred_check
          %p317 = pneg %p114
        $region50: #{tpu_custom_call.1} parent=47 // pred_check_branch
          %319 = sbr.rel (%p317) target = $region52
        $region51: #{tpu_custom_call.1} parent=47 // pred_region
          %s320 = sand.u32 %s99, 1
          %s321 = scalar_lea.sflag [#allocation5], %s320
          %s322 = sand.u32 %s99, 1
          %s323 = smul.addr %s322, 16
          %s324 = scalar_lea.vmem [#allocation8], %s323
          %325 = dma.done %s321, 256
        $region52: #{tpu_custom_call.1} parent=47 // pred_fallthru
          _
      $region48: #{tpu_custom_call.1} parent=5 // pred_fallthru
        _
    $region6: #{tpu_custom_call.1} parent=1 // loop_footer
      %s17 = sadd.s32 1, %s13
    $region7: #{tpu_custom_call.1} parent=1 // loop_footer_branch
      %12 = sbr.rel target = $region3
    $region8: #{tpu_custom_call.1} parent=1 // loop_exit
      _
    %326 = vsyncpa [#allocation4], 1
    %s327 = scalar_lea.sflag [#allocation4], 1
    %328 = vsyncpa %s327, 1
    %329 = vsyncpa [#allocation7], 1
    %330 = vsyncpa [#allocation5], 1
    %s331 = scalar_lea.sflag [#allocation5], 1
    %332 = vsyncpa %s331, 1

// kernel: tpu_custom_call.1
$region0: #{tpu_custom_call.1}
  #allocation0 [shape = 'u32[]', space=smem, size = 0x4, offset = 0x4, fixed_abs, tag = 'smem constant byte address 0x4 - core index']
  #allocation1 [shape = 'u32[144,128]{1,0:T(1,128)}', space=vmem, size = 0x12000, scoped, tag = 'internal scratch']
  #allocation2 [shape = 'f32[2,8,64]{2,1,0:T(8,128)}', space=vmem, size = 0x2000, scoped, tag = 'scratch operand']
  %s0 = inlined_call_operand.hbm [shape: f32[2,8,32], index: 0, kind: input, shape index: {}]
  %s1 = inlined_call_operand.hbm [shape: f32[32,64], index: 1, kind: input, shape index: {}]
  %s2 = inlined_call_operand.hbm [shape: f32[2,2,8,64], index: 2, kind: output, shape index: {}]
  %s3 = sld [smem:[#allocation0]]
  $region53: #{tpu_custom_call.1} parent=0
    _
  %s5 = ssub.s32 1, %s3
  %s6 = scalar_select 0, %s5, %s3
  $region1: #{tpu_custom_call.1} parent=0
    #allocation3 [shape = 'u8[8192]{0}', space=vmem, size = 0x2000, scoped, tag = 'input window, operand 0, single buffered']
    #allocation4 [shape = 's32[2]{0}', space=sflag, size = 0x8, scoped, tag = 'scoped memory for tpu_custom_call.1']
    #allocation5 [shape = 's32[2]{0}', space=sflag, size = 0x8, scoped, tag = 'scoped memory for tpu_custom_call.1']
    #allocation6 [shape = 'u8[16384]{0}', space=vmem, size = 0x4000, scoped, tag = 'input window, operand 1, single buffered']
    #allocation7 [shape = 's32[1]{0}', space=sflag, size = 0x4, scoped, tag = 'scoped memory for tpu_custom_call.1']
    #allocation8 [shape = 'u8[16384]{0}', space=vmem, size = 0x4000, scoped, tag = 'output window, operand 0']
    %7 = vsyncpa [#allocation4], 0
    %8 = vsyncpa [#allocation7], 0
    %9 = vsyncpa [#allocation5], 0
    %s10 = scalar_lea.sflag [#allocation5], 1
    %11 = vsyncpa %s10, 0
    loop: start=0, step=1, limit=4
    $region2: #{tpu_custom_call.1} parent=1 // loop_pre_header
      _
    $region3: #{tpu_custom_call.1} parent=1 // loop_header
      %s13 = sphi 0, %s17
      %p14 = scmp.ge.s32.totalorder %s13, 4
      %s20 = sphi 0, %s39
      %s21 = sphi 0, %s35
      %s22 = sphi 0, %s31
      %s23 = sphi 0, %s20
      %s24 = sphi 0, %s21
      %s25 = sphi 0, %s22
      %s26 = sphi 0, %s23
      %s27 = sphi 0, %s24
      %s28 = sphi 0, %s25
      %s44 = sphi 0, %s46
      %s47 = sphi 0, %s44
      %s48 = sphi 0, %s47
      %s64 = sphi 0, %s48
      %s68 = sphi 0, %s68
      %s70 = sphi 0, %s68
      %s71 = sphi 0, %s70
      %s85 = sphi 0, %s71
      %s95 = sphi 0, %s97
      %s98 = sphi 0, %s95
      %s99 = sphi 0, %s98
      %s115 = sphi 0, %s99
    $region4: #{tpu_custom_call.1} parent=1 // loop_header_branch
      %16 = sbr.rel (%p14) target = $region8
    $region5: #{tpu_custom_call.1} parent=1 // loop_body
      %s18 = ssub.s32 %s13, 1
      %s19 = ssub.s32 %s13, 2
      %s29 = sadd.s32 1, %s22
      %p30 = scmp.ge.s32.totalorder %s29, 2
      %s31 = scalar_select %p30, 0, %s29
      %s32 = sadd.s32 1, %s21
      %s33 = scalar_select %p30, %s32, %s21
      %p34 = scmp.ge.s32.totalorder %s33, 1
      %s35 = scalar_select %p34, 0, %s33
      %s36 = sadd.s32 1, %s20
      %s37 = scalar_select %p34, %s36, %s20
      %p38 = scmp.ge.s32.totalorder %s37, 1
      %s39 = scalar_select %p38, 0, %s37
      %s40 = ssub.s32 %s20, %s39
      %s41 = ssub.s32 %s21, %s35
      %s42 = sor.u32 %s40, %s41
      %p43 = scmp.eq.s32.totalorder %s42, 0
      %s45 = sadd.s32 %s44, 1
      %s46 = scalar_select %p43, %s44, %s45
      %p49 = pneg %p43
      %p50 = scmp.eq.s32.totalorder %s13, 1
      %p51 = por %p49, %p50
      %p52 = scmp.ne.s32.totalorder %s44, %s47
      %p53 = scmp.eq.s32.totalorder %s13, 0
      %p54 = por %p52, %p53
      %p55 = scmp.ne.s32.totalorder %s44, %s47
      %p56 = scmp.eq.s32.totalorder %s18, 1
      %p57 = por %p55, %p56
      %p58 = scmp.ne.s32.totalorder %s47, %s48
      %p59 = scmp.eq.s32.totalorder %s18, 0
      %p60 = por %p58, %p59
      %p61 = scmp.ne.s32.totalorder %s47, %s48
      %p62 = scmp.eq.s32.totalorder %s19, 1
      %p63 = por %p61, %p62
      %p65 = scmp.ne.s32.totalorder %s48, %s64
      %p66 = scmp.eq.s32.totalorder %s19, 0
      %p67 = por %p65, %p66
      %s69 = sadd.s32 %s68, 1
      %p72 = scmp.eq.s32.totalorder %s13, 1
      %p73 = scmp.ne.s32.totalorder %s68, %s70
      %p74 = scmp.eq.s32.totalorder %s13, 0
      %p75 = por %p73, %p74
      %p76 = scmp.ne.s32.totalorder %s68, %s70
      %p77 = scmp.eq.s32.totalorder %s18, 1
      %p78 = por %p76, %p77
      %p79 = scmp.ne.s32.totalorder %s70, %s71
      %p80 = scmp.eq.s32.totalorder %s18, 0
      %p81 = por %p79, %p80
      %p82 = scmp.ne.s32.totalorder %s70, %s71
      %p83 = scmp.eq.s32.totalorder %s19, 1
      %p84 = por %p82, %p83
      %p86 = scmp.ne.s32.totalorder %s71, %s85
      %p87 = scmp.eq.s32.totalorder %s19, 0
      %p88 = por %p86, %p87
      %s89 = ssub.s32 %s20, %s39
      %s90 = ssub.s32 %s22, %s31
      %s91 = sor.u32 %s89, %s90
      %s92 = ssub.s32 %s21, %s35
      %s93 = sor.u32 %s91, %s92
      %p94 = scmp.eq.s32.totalorder %s93, 0
      %s96 = sadd.s32 %s95, 1
      %s97 = scalar_select %p94, %s95, %s96
      %p100 = pneg %p94
      %p101 = scmp.eq.s32.totalorder %s13, 1
      %p102 = por %p100, %p101
      %p103 = scmp.ne.s32.totalorder %s95, %s98
      %p104 = scmp.eq.s32.totalorder %s13, 0
      %p105 = por %p103, %p104
      %p106 = scmp.ne.s32.totalorder %s95, %s98
      %p107 = scmp.eq.s32.totalorder %s18, 1
      %p108 = por %p106, %p107
      %p109 = scmp.ne.s32.totalorder %s98, %s99
      %p110 = scmp.eq.s32.totalorder %s18, 0
      %p111 = por %p109, %p110
      %p112 = scmp.ne.s32.totalorder %s98, %s99
      %p113 = scmp.eq.s32.totalorder %s19, 1
      %p114 = por %p112, %p113
      %p116 = scmp.ne.s32.totalorder %s99, %s115
      %p117 = scmp.eq.s32.totalorder %s19, 0
      %p118 = por %p116, %p117
      %p119 = scmp.le.s32.totalorder 1, %s13
      %p120 = scmp.lt.s32.totalorder %s13, 3
      %p121 = pnand %p119, %p120
      %p122 = pneg %p121
      // Predicated region
      $region9: #{tpu_custom_call.1} parent=5 // pred_check
        _
      $region10: #{tpu_custom_call.1} parent=5 // pred_check_branch
        %124 = sbr.rel (%p121) target = $region12
      $region11: #{tpu_custom_call.1} parent=5 // pred_region
        %s125 = ssub.s32 %s13, 1
        // Predicated region
        $region13: #{tpu_custom_call.1} parent=11 // pred_check
          %p126 = pneg %p60
        $region14: #{tpu_custom_call.1} parent=11 // pred_check_branch
          %128 = sbr.rel (%p126) target = $region16
        $region15: #{tpu_custom_call.1} parent=11 // pred_region
          %s129 = smul.u32 2, %s23
          %s131 = ssub.s32 256, 256
          %132 = vsyncadd [#allocation4], %s131
          %s133 = sadd.s32 %s24, %s129
          %s134 = smul.addr %s133, 128
          %s135 = scalar_lea.hbm %s0, %s134
          %s136 = sshll.u32 [#allocation3], 4
          %s137 = int_to_ptr.vmem [resolvable:$true] %s136
          %142 = dma.hbm_to_vmem [thread:$0]  %s135, 256, %s137, [#allocation4], 128, 128, 8
        $region16: #{tpu_custom_call.1} parent=11 // pred_fallthru
          _
        // Predicated region
        $region17: #{tpu_custom_call.1} parent=11 // pred_check
          %p143 = pneg %p81
        $region18: #{tpu_custom_call.1} parent=11 // pred_check_branch
          %145 = sbr.rel (%p143) target = $region20
        $region19: #{tpu_custom_call.1} parent=11 // pred_region
          %s147 = ssub.s32 512, 512
          %148 = vsyncadd [#allocation7], %s147
          %s149 = sshll.u32 [#allocation6], 4
          %s150 = int_to_ptr.vmem [resolvable:$true] %s149
          %155 = dma.hbm_to_vmem [thread:$0]  %s1, 512, %s150, [#allocation7], 128, 128, 8
        $region20: #{tpu_custom_call.1} parent=11 // pred_fallthru
          _
      $region12: #{tpu_custom_call.1} parent=5 // pred_fallthru
        _
      %p156 = scmp.lt.s32.totalorder %s13, 2
      // Predicated region
      $region21: #{tpu_custom_call.1} parent=5 // pred_check
        %p157 = pneg %p156
      $region22: #{tpu_custom_call.1} parent=5 // pred_check_branch
        %159 = sbr.rel (%p157) target = $region24
      $region23: #{tpu_custom_call.1} parent=5 // pred_region
        _
      $region24: #{tpu_custom_call.1} parent=5 // pred_fallthru
        _
      %p160 = scmp.le.s32.totalorder 1, %s13
      %p161 = scmp.lt.s32.totalorder %s13, 3
      %p162 = pnand %p160, %p161
      %p163 = pneg %p162
      // Predicated region
      $region25: #{tpu_custom_call.1} parent=5 // pred_check
        _
      $region26: #{tpu_custom_call.1} parent=5 // pred_check_branch
        %165 = sbr.rel (%p162) target = $region28
      $region27: #{tpu_custom_call.1} parent=5 // pred_region
        %s166 = ssub.s32 %s13, 1
        // Predicated region
        $region29: #{tpu_custom_call.1} parent=27 // pred_check
          %p167 = pneg %p60
        $region30: #{tpu_custom_call.1} parent=27 // pred_check_branch
          %169 = sbr.rel (%p167) target = $region32
        $region31: #{tpu_custom_call.1} parent=27 // pred_region
          %170 = dma.done [#allocation4], 256
        $region32: #{tpu_custom_call.1} parent=27 // pred_fallthru
          _
        // Predicated region
        $region33: #{tpu_custom_call.1} parent=27 // pred_check
          %p171 = pneg %p81
        $region34: #{tpu_custom_call.1} parent=27 // pred_check_branch
          %173 = sbr.rel (%p171) target = $region36
        $region35: #{tpu_custom_call.1} parent=27 // pred_region
          %174 = dma.done [#allocation7], 512
        $region36: #{tpu_custom_call.1} parent=27 // pred_fallthru
          _
        %p175 = pneg %p60
        %p176 = pneg %p57
        %p177 = pneg %p81
        %p178 = pneg %p78
        %p179 = pneg %p111
        %p180 = pneg %p108
        %s181 = sand.u32 %s98, 1
        %s182 = scalar_lea.sflag [#allocation5], %s181
        %s183 = sand.u32 %s98, 1
        %s184 = smul.addr %s183, 16
        %s185 = scalar_lea.vmem [#allocation8], %s184
        %s186 = smul.u32 2, %s23
        %s187 = smul.u32 2, %s23
        %p188 = scmp.eq.s32.totalorder %s25, 0
        // Predicated region
        $region37: #{tpu_custom_call.1} parent=27 // pred_check
          %p189 = pneg %p188
        $region38: #{tpu_custom_call.1} parent=27 // pred_check_branch
          %191 = sbr.rel (%p189) target = $region40
        $region39: #{tpu_custom_call.1} parent=27 // pred_region
          %v192 = vld [vmem:[#allocation3] sm:$0xff]
          %v193 = vld [vmem:[#allocation3 + $0x8] sm:$0xff]
          %v194 = vld [vmem:[#allocation6] sm:$0xff]
          %v195 = vld [vmem:[#allocation6 + $0x8] sm:$0xff]
          %v196 = vld [vmem:[#allocation6 + $0x10] sm:$0xff]
          %v197 = vld [vmem:[#allocation6 + $0x18] sm:$0xff]
          %vm198 = vcmask 261120
          %v200 = vsel %vm198, %v192, 0
          %v203 = vsel %vm198, %v193, 0
          %205 = vmatprep.subr.mxu0 0.0
          %206 = vmatpush1.msra.mxu0 %v194
          %207 = vmatprep.subr.mxu0 0.0
          %208 = vmatpush1.msra.mxu0 %v195
          %209 = vmatprep.subr.mxu0 0.0
          %210 = vmatpush1.msra.mxu0 %v196
          %211 = vmatprep.subr.mxu0 0.0
          %212 = vmatpush1.msra.mxu0 %v197
          %213 = vmatprep.subr.mxu0 0.0
          %214 = vmatpush1.msra.mxu0 0.0
          %215 = vmatprep.subr.mxu0 0.0
          %216 = vmatpush1.msra.mxu0 0.0
          %217 = vmatprep.subr.mxu0 0.0
          %218 = vmatpush1.msra.mxu0 0.0
          %219 = vmatprep.subr.mxu0 0.0
          %220 = vmatpush1.msra.mxu0 0.0
          %221 = vmatprep.subr.mxu0 0.0
          %222 = vmatpush1.msra.mxu0 0.0
          %223 = vmatprep.subr.mxu0 0.0
          %224 = vmatpush1.msra.mxu0 0.0
          %225 = vmatprep.subr.mxu0 0.0
          %226 = vmatpush1.msra.mxu0 0.0
          %227 = vmatprep.subr.mxu0 0.0
          %228 = vmatpush1.msra.mxu0 0.0
          %229 = vmatprep.subr.mxu0 0.0
          %230 = vmatpush1.msra.mxu0 0.0
          %231 = vmatprep.subr.mxu0 0.0
          %232 = vmatpush1.msra.mxu0 0.0
          %233 = vmatprep.subr.mxu0 0.0
          %234 = vmatpush1.msra.mxu0 0.0
          %235 = vmatprep.subr.mxu0 0.0
          %236 = vmatpush1.msra.mxu0 0.0
          %237 = vmatprep.subr.mxu0 0.0
          %238 = vmatpush1.msra.mxu0 0.0
          %239 = vmatprep.subr.mxu0 0.0
          %240 = vmatpush1.msra.mxu0 0.0
          %241 = vmatprep.subr.mxu0 0.0
          %242 = vmatpush1.msra.mxu0 0.0
          %243 = vmatprep.subr.mxu0 0.0
          %244 = vmatpush1.msra.mxu0 0.0
          %245 = vmatprep.subr.mxu0 0.0
          %246 = vmatpush1.msra.mxu0 0.0
          %247 = vmatprep.subr.mxu0 0.0
          %248 = vmatpush1.msra.mxu0 0.0
          %249 = vmatprep.subr.mxu0 0.0
          %250 = vmatpush1.msra.mxu0 0.0
          %251 = vmatprep.subr.mxu0 0.0
          %252 = vmatpush1.msra.mxu0 0.0
          %253 = vmatprep.subr.mxu0 0.0
          %254 = vmatpush1.msra.mxu0 0.0
          %255 = vmatprep.subr.mxu0 0.0
          %256 = vmatpush1.msra.mxu0 0.0
          %257 = vmatprep.subr.mxu0 0.0
          %258 = vmatpush1.msra.mxu0 0.0
          %259 = vmatprep.subr.mxu0 0.0
          %260 = vmatpush1.msra.mxu0 0.0
          %261 = vmatprep.subr.mxu0 0.0
          %262 = vmatpush1.msra.mxu0 0.0
          %263 = vmatprep.subr.mxu0 0.0
          %264 = vmatpush1.msra.mxu0 0.0
          %265 = vmatprep.subr.mxu0 0.0
          %266 = vmatpush1.msra.mxu0 0.0
          %267 = vmatprep.subr.mxu0 0.0
          %268 = vmatpush1.msra.mxu0 0.0
          %269 = vmatprep.mubr.f32.mxu0 0.0
          %270 = vmatmul.mubr.f32.gmra.mrb[0].mxu0 %v200
          %v271 = vpop.f32.mrb[0].mxu0
          %v272 = vadd.f32 0.0, %v271
          %v273 = vpop.f32.mrb[0].mxu0
          %274 = vmatprep.mubr.f32.mxu0 0.0
          %275 = vmatmul.mubr.f32.gmra.mrb[0].mxu0 %v203
          %v276 = vpop.f32.mrb[0].mxu0
          %v277 = vadd.f32 0.0, %v276
          %v278 = vpop.f32.mrb[0].mxu0
          %279 = vdwg.mxu0
          %vm280 = vcmask 523264
          %281 = vst.msk [vmem:[#allocation2] sm:$0xff] %vm280, %v272
          %282 = vst.msk [vmem:[#allocation2 + $0x8] sm:$0xff] %vm280, %v277
        $region40: #{tpu_custom_call.1} parent=27 // pred_fallthru
          _
        %v283 = vld [vmem:[#allocation2] sm:$0xff]
        %v284 = vld [vmem:[#allocation2 + $0x8] sm:$0xff]
        %vm285 = vcmask 523264
        %286 = vst.msk [vmem:[%s185] sm:$0xff] %vm285, %v283
        %287 = vst.msk [vmem:[%s185 + $0x8] sm:$0xff] %vm285, %v284
        %s288 = sand.u32 %s98, 1
        %s289 = scalar_lea.sflag [#allocation5], %s288
        %s290 = sand.u32 %s98, 1
        %s291 = smul.addr %s290, 16
        %s292 = scalar_lea.vmem [#allocation8], %s291
        // Predicated region
        $region41: #{tpu_custom_call.1} parent=27 // pred_check
          %p293 = pneg %p108
        $region42: #{tpu_custom_call.1} parent=27 // pred_check_branch
          %295 = sbr.rel (%p293) target = $region44
        $region43: #{tpu_custom_call.1} parent=27 // pred_region
          %s296 = smul.u32 2, %s23
          %s298 = ssub.s32 256, 256
          %299 = vsyncadd %s289, %s298
          %s300 = sadd.s32 %s24, %s25
          %s301 = smul.addr %s296, 2
          %s302 = sadd.s32 %s300, %s301
          %s303 = smul.addr %s302, 128
          %s304 = scalar_lea.hbm %s2, %s303
          %s305 = sshll.u32 %s292, 4
          %s306 = int_to_ptr.vmem [resolvable:$true] %s305
          %311 = dma.vmem_to_hbm [thread:$0]  %s306, 256, %s304, %s289, 128, 256, 8
        $region44: #{tpu_custom_call.1} parent=27 // pred_fallthru
          _
      $region28: #{tpu_custom_call.1} parent=5 // pred_fallthru
        _
      %p312 = scmp.le.s32.totalorder 2, %s13
      // Predicated region
      $region45: #{tpu_custom_call.1} parent=5 // pred_check
        %p313 = pneg %p312
      $region46: #{tpu_custom_call.1} parent=5 // pred_check_branch
        %315 = sbr.rel (%p313) target = $region48
      $region47: #{tpu_custom_call.1} parent=5 // pred_region
        %s316 = ssub.s32 %s13, 2
        // Predicated region
        $region49: #{tpu_custom_call.1} parent=47 // pred_check
          %p317 = pneg %p114
        $region50: #{tpu_custom_call.1} parent=47 // pred_check_branch
          %319 = sbr.rel (%p317) target = $region52
        $region51: #{tpu_custom_call.1} parent=47 // pred_region
          %s320 = sand.u32 %s99, 1
          %s321 = scalar_lea.sflag [#allocation5], %s320
          %s322 = sand.u32 %s99, 1
          %s323 = smul.addr %s322, 16
          %s324 = scalar_lea.vmem [#allocation8], %s323
          %325 = dma.done %s321, 256
        $region52: #{tpu_custom_call.1} parent=47 // pred_fallthru
          _
      $region48: #{tpu_custom_call.1} parent=5 // pred_fallthru
        _
    $region6: #{tpu_custom_call.1} parent=1 // loop_footer
      %s17 = sadd.s32 1, %s13
    $region7: #{tpu_custom_call.1} parent=1 // loop_footer_branch
      %12 = sbr.rel target = $region3
    $region8: #{tpu_custom_call.1} parent=1 // loop_exit
      _
    %326 = vsyncpa [#allocation4], 1
    %s327 = scalar_lea.sflag [#allocation4], 1
    %328 = vsyncpa %s327, 1
    %329 = vsyncpa [#allocation7], 1
    %330 = vsyncpa [#allocation5], 1
    %s331 = scalar_lea.sflag [#allocation5], 1
    %332 = vsyncpa %s331, 1

</llo_original>
